<compile_context>
chip_gen: v7x
topology: tpu7x:2x2x1
jax: 0.10.0
libtpu: 0.0.40
codegen_flags: <defaults>
</compile_context>

<pallas_src>
import math
import functools

import jax
import jax.numpy as jnp
from jax import lax
from jax.experimental import pallas as pl
from jax.experimental.pallas import tpu as pltpu


_NEG_BIG = -1e30  # large finite negative: safe masking, no NaN from exp(-inf+inf)


# ----------------------------------------------------------------------------
# Tile selection helpers
# ----------------------------------------------------------------------------
def _row_tile(m):
    for c in (512, 256, 128):
        if m % c == 0:
            return c
    if m <= 512:
        return m            # full dim is always a legal block size
    return 128              # cdiv grid; OOB rows of the last block are dropped


def _col_tile(n):
    for c in (512, 256, 128):
        if n % c == 0:
            return c
    return n                # full dim (lane-dense by being the full array dim)


def _kv_tile_candidates():
    # tkb=256 fills the 256-wide MXU on v6e/v7x; v5e's MXU is 128-wide.
    try:
        kind = jax.devices()[0].device_kind.lower()
    except Exception:
        return (128,)
    if "v6" in kind or "v7" in kind:
        return (256, 128)
    return (128,)


def _attn_tiles(s):
    """Return (q_tile, kv_tile, padded_seq_len)."""
    if s % 128 == 0:
        tq, s_pad = 128, s
    elif s <= 256:
        tq, s_pad = s, s
    else:
        tq = 128
        s_pad = -(-s // 128) * 128
    tkb = next((c for c in _kv_tile_candidates() if c <= s_pad and s_pad % c == 0),
               tq)
    return tq, tkb, s_pad


# ----------------------------------------------------------------------------
# Fused c_attn:  q = x@Wq + bq, k = x@Wk + bk, v = x@Wv + bv
# Full-K weight panels resident; x is read from HBM once per (i, j) tile.
# ----------------------------------------------------------------------------
def _qkv_kernel(x_ref, wq_ref, wk_ref, wv_ref, bq_ref, bk_ref, bv_ref,
                q_ref, k_ref, v_ref):
    x = x_ref[...]
    for w_ref, b_ref, o_ref in ((wq_ref, bq_ref, q_ref),
                                (wk_ref, bk_ref, k_ref),
                                (wv_ref, bv_ref, v_ref)):
        acc = jnp.dot(x, w_ref[...], preferred_element_type=jnp.float32)
        o_ref[...] = (acc + b_ref[...]).astype(o_ref.dtype)


def qkv_projection(x2d, w_q, w_k, w_v, b_q, b_k, b_v, *, out_dtype=None):
    m, k = x2d.shape
    k2, n = w_q.shape
    assert k == k2
    out_dtype = out_dtype or x2d.dtype
    tm, tn = _row_tile(m), _col_tile(n)

    x_spec = pl.BlockSpec((tm, k), lambda i, j: (i, 0))

    def w_spec():
        return pl.BlockSpec((k, tn), lambda i, j: (0, j))

    def b_spec():
        return pl.BlockSpec((1, tn), lambda i, j: (0, j))

    def o_spec():
        return pl.BlockSpec((tm, tn), lambda i, j: (i, j))

    b_q = b_q.reshape(1, n).astype(jnp.float32)
    b_k = b_k.reshape(1, n).astype(jnp.float32)
    b_v = b_v.reshape(1, n).astype(jnp.float32)

    return pl.pallas_call(
        _qkv_kernel,
        out_shape=tuple(jax.ShapeDtypeStruct((m, n), out_dtype) for _ in range(3)),
        grid=(pl.cdiv(m, tm), pl.cdiv(n, tn)),
        in_specs=[x_spec, w_spec(), w_spec(), w_spec(),
                  b_spec(), b_spec(), b_spec()],
        out_specs=[o_spec(), o_spec(), o_spec()],
        compiler_params=pltpu.CompilerParams(
            dimension_semantics=("parallel", "parallel"),
            vmem_limit_bytes=48 * 1024 * 1024),
    )(x2d, w_q, w_k, w_v, b_q, b_k, b_v)


# ----------------------------------------------------------------------------
# Single-output linear (c_proj):  out = x @ W + b
# ----------------------------------------------------------------------------
def _linear_kernel(x_ref, w_ref, b_ref, o_ref):
    acc = jnp.dot(x_ref[...], w_ref[...], preferred_element_type=jnp.float32)
    o_ref[...] = (acc + b_ref[...]).astype(o_ref.dtype)


def linear(x2d, w, b, *, out_dtype=None):
    m, k = x2d.shape
    k2, n = w.shape
    assert k == k2
    out_dtype = out_dtype or x2d.dtype
    tm, tn = _row_tile(m), _col_tile(n)
    b2d = b.reshape(1, n).astype(jnp.float32)

    return pl.pallas_call(
        _linear_kernel,
        out_shape=jax.ShapeDtypeStruct((m, n), out_dtype),
        grid=(pl.cdiv(m, tm), pl.cdiv(n, tn)),
        in_specs=[
            pl.BlockSpec((tm, k), lambda i, j: (i, 0)),
            pl.BlockSpec((k, tn), lambda i, j: (0, j)),
            pl.BlockSpec((1, tn), lambda i, j: (0, j)),
        ],
        out_specs=pl.BlockSpec((tm, tn), lambda i, j: (i, j)),
        compiler_params=pltpu.CompilerParams(
            dimension_semantics=("parallel", "parallel"),
            vmem_limit_bytes=48 * 1024 * 1024),
    )(x2d, w, b2d)


# ----------------------------------------------------------------------------
# Flash attention: grid = (B, q_tiles, kv_tiles); all heads handled inside the
# kernel so inputs stay token-major and the output is already head-merged.
# ----------------------------------------------------------------------------
def _flash_kernel(q_ref, k_ref, v_ref, o_ref,
                  qs_ref, m_sc, l_sc, acc_sc, *,
                  scale, use_mask, num_heads, head_dim, tq, tkb,
                  seq_len, pad_cols, recip_approx):
    qi = pl.program_id(1)
    ki = pl.program_id(2)
    nkv = pl.num_programs(2)
    nh, d = num_heads, head_dim

    @pl.when(ki == 0)
    def _init():
        # Fold the softmax scale into Q once per Q tile (not per KV step).
        qs_ref[...] = (q_ref[0].astype(jnp.float32) * scale).astype(qs_ref.dtype)
        m_sc[...] = jnp.full_like(m_sc, _NEG_BIG)
        l_sc[...] = jnp.zeros_like(l_sc)
        acc_sc[...] = jnp.zeros_like(acc_sc)

    def step(apply_mask):
        if apply_mask:
            row = lax.broadcasted_iota(jnp.int32, (tq, tkb), 0) + qi * tq
            col = lax.broadcasted_iota(jnp.int32, (tq, tkb), 1) + ki * tkb
            valid = None
            if use_mask:
                valid = row >= col
            if pad_cols:
                cv = col < seq_len
                valid = cv if valid is None else jnp.logical_and(valid, cv)
        for h in range(nh):
            sl = slice(h * d, (h + 1) * d)
            q_h = qs_ref[:, sl]                       # (tq, d), pre-scaled
            k_h = k_ref[0, :, sl]                     # (tkb, d)
            v_h = v_ref[0, :, sl]                     # (tkb, d)
            # contract last dims directly (no k.T / XLU transpose)
            s = lax.dot_general(q_h, k_h, (((1,), (1,)), ((), ())),
                                preferred_element_type=jnp.float32)
            if apply_mask:
                s = jnp.where(valid, s, _NEG_BIG)
            m_prev = m_sc[h]
            m_new = jnp.maximum(m_prev, jnp.max(s, axis=-1, keepdims=True))
            alpha = jnp.exp(m_prev - m_new)
            p = jnp.exp(s - m_new)
            l_sc[h] = alpha * l_sc[h] + jnp.sum(p, axis=-1, keepdims=True)
            acc_sc[h] = alpha * acc_sc[h] + jnp.dot(
                p.astype(v_h.dtype), v_h, preferred_element_type=jnp.float32)
            m_sc[h] = m_new

    if use_mask:
        limit = (qi * tq + tq - 1) // tkb              # last useful KV block
        interior = (ki * tkb + tkb - 1) <= (qi * tq)   # fully unmasked block
        diag = jnp.logical_and(ki <= limit, jnp.logical_not(interior))
        if pad_cols:
            has_pad = ki == nkv - 1
            diag = jnp.logical_or(diag, jnp.logical_and(ki <= limit, has_pad))
            interior = jnp.logical_and(interior, jnp.logical_not(has_pad))
        pl.when(interior)(lambda: step(False))
        pl.when(diag)(lambda: step(True))
        last_step = ki == limit
    else:
        if pad_cols:
            pl.when(ki < nkv - 1)(lambda: step(False))
            pl.when(ki == nkv - 1)(lambda: step(True))
        else:
            step(False)
        last_step = ki == nkv - 1

    @pl.when(last_step)
    def _epilogue():
        for h in range(nh):
            inv = pl.reciprocal(l_sc[h], approx=recip_approx)
            o_ref[0, :, h * d:(h + 1) * d] = (acc_sc[h] * inv).astype(o_ref.dtype)


def attention_core(q, k, v, *, num_heads, scale, use_mask, out_dtype=None):
    """q, k, v: (B, S, H) token-major; returns head-merged (B, S, H)."""
    b, s, h = q.shape
    d = h // num_heads
    out_dtype = out_dtype or q.dtype
    cd = q.dtype

    tq, tkb, s_pad = _attn_tiles(s)
    if s_pad != s:
        pad = ((0, 0), (0, s_pad - s), (0, 0))
        q, k, v = jnp.pad(q, pad), jnp.pad(k, pad), jnp.pad(v, pad)

    def q_map(bi, qi, ki):
        return (bi, qi, 0)

    def kv_map(bi, qi, ki):
        if use_mask:
            limit = (qi * tq + tq - 1) // tkb
            ki = jnp.minimum(ki, limit)  # skipped steps reuse the block: no DMA
        return (bi, ki, 0)

    kern = functools.partial(
        _flash_kernel, scale=scale, use_mask=use_mask, num_heads=num_heads,
        head_dim=d, tq=tq, tkb=tkb, seq_len=s, pad_cols=(s_pad != s),
        recip_approx=(jnp.dtype(out_dtype) != jnp.dtype(jnp.float32)))

    out = pl.pallas_call(
        kern,
        out_shape=jax.ShapeDtypeStruct((b, s_pad, h), out_dtype),
        grid=(b, s_pad // tq, s_pad // tkb),
        in_specs=[
            pl.BlockSpec((1, tq, h), q_map),
            pl.BlockSpec((1, tkb, h), kv_map),
            pl.BlockSpec((1, tkb, h), kv_map),
        ],
        out_specs=pl.BlockSpec((1, tq, h), q_map),
        scratch_shapes=[
            pltpu.VMEM((tq, h), cd),                      # scaled Q (resident)
            pltpu.VMEM((num_heads, tq, 1), jnp.float32),  # running max
            pltpu.VMEM((num_heads, tq, 1), jnp.float32),  # running denominator
            pltpu.VMEM((num_heads, tq, d), jnp.float32),  # output accumulator
        ],
        compiler_params=pltpu.CompilerParams(
            dimension_semantics=("parallel", "parallel", "arbitrary"),
            vmem_limit_bytes=48 * 1024 * 1024),
    )(q, k, v)

    if s_pad != s:
        out = out[:, :s, :]
    return out


# ----------------------------------------------------------------------------
# Full Attention module forward
# ----------------------------------------------------------------------------
class AttentionParams:
    def __init__(self, key, hidden_size, num_heads, layer_idx=None,
                 scale_attn_by_layer_idx=False, use_mask=True):
        assert hidden_size % num_heads == 0
        self.hidden_size = hidden_size
        self.num_heads = num_heads
        self.num_div = hidden_size // num_heads
        self.layer_idx = layer_idx
        self.scale_by_index = scale_attn_by_layer_idx
        self.use_mask = use_mask
        k1, k2 = jax.random.split(key)
        hs = hidden_size
        # Conv1D weights: (c1, c2), normal(std=0.02); biases zeros.
        self.w_attn = 0.02 * jax.random.normal(k1, (hs, 3 * hs), dtype=jnp.float32)
        self.b_attn = jnp.zeros((3 * hs,), dtype=jnp.float32)
        # Pre-split q/k/v panels (done once; avoids per-call weight slicing).
        self.w_q = self.w_attn[:, :hs]
        self.w_k = self.w_attn[:, hs:2 * hs]
        self.w_v = self.w_attn[:, 2 * hs:]
        self.b_q = self.b_attn[:hs]
        self.b_k = self.b_attn[hs:2 * hs]
        self.b_v = self.b_attn[2 * hs:]
        self.w_proj = 0.02 * jax.random.normal(k2, (hs, hs), dtype=jnp.float32)
        self.b_proj = jnp.zeros((hs,), dtype=jnp.float32)


def attention_forward(params: AttentionParams, hidden_state, *,
                      compute_dtype=jnp.bfloat16):
    """hidden_state: (B, S, H) float32 -> (B, S, H) float32.

    compute_dtype controls the MXU input dtype (f32 accumulation always).
    """
    b, s, h = hidden_state.shape
    nh, d = params.num_heads, params.num_div
    cd = jnp.dtype(compute_dtype)

    x2d = hidden_state.reshape(b * s, h).astype(cd)

    # fused c_attn -> q, k, v already in token-major (B*S, H) layout
    q2d, k2d, v2d = qkv_projection(
        x2d,
        params.w_q.astype(cd), params.w_k.astype(cd), params.w_v.astype(cd),
        params.b_q, params.b_k, params.b_v,
        out_dtype=cd)

    q = q2d.reshape(b, s, h)
    k = k2d.reshape(b, s, h)
    v = v2d.reshape(b, s, h)

    scale = 1.0 / math.sqrt(d)
    if params.scale_by_index:
        scale = scale / float(params.layer_idx)

    # flash attention with in-kernel head handling -> merged (B, S, H)
    merged = attention_core(q, k, v, num_heads=nh, scale=scale,
                            use_mask=params.use_mask, out_dtype=cd)

    # c_proj
    out = linear(merged.reshape(b * s, h), params.w_proj.astype(cd),
                 params.b_proj, out_dtype=hidden_state.dtype)
    # TODO(synk): attn/residual dropout omitted (eval-mode identity).
    return out.reshape(b, s, h)


# ----------------------------------------------------------------------------
# Pure-JAX reference (for sanity check)
# ----------------------------------------------------------------------------
def attention_reference(params: AttentionParams, hidden_state):
    b, s, h = hidden_state.shape
    nh, d = params.num_heads, params.num_div
    x2d = hidden_state.reshape(b * s, h)
    qkv = (x2d @ params.w_attn + params.b_attn).reshape(b, s, 3 * h)
    q, k, v = jnp.split(qkv, 3, axis=-1)
    sh = lambda t: t.reshape(b, s, nh, d).transpose(0, 2, 1, 3)
    q, k, v = sh(q), sh(k), sh(v)
    sc = jnp.einsum("bhqd,bhkd->bhqk", q, k) / math.sqrt(d)
    if params.scale_by_index:
        sc = sc / float(params.layer_idx)
    if params.use_mask:
        causal = jnp.tril(jnp.ones((s, s), dtype=bool))
        sc = jnp.where(causal[None, None], sc, -jnp.inf)
    p = jax.nn.softmax(sc, axis=-1)
    o = jnp.einsum("bhqk,bhkd->bhqd", p, v)
    merged = o.transpose(0, 2, 1, 3).reshape(b * s, h)
    out = merged @ params.w_proj + params.b_proj
    return out.reshape(b, s, h)


if __name__ == "__main__":
    key = jax.random.PRNGKey(0)
    kp, kx = jax.random.split(key)

    B, S, H, NH = 2, 8, 32, 4
    params = AttentionParams(kp, hidden_size=H, num_heads=NH,
                             layer_idx=2, scale_attn_by_layer_idx=False,
                             use_mask=True)
    x = jax.random.normal(kx, (B, S, H), dtype=jnp.float32)

    ref = attention_reference(params, x)

    # exact-precision (f32) path: tight check against the reference
    out_f32 = attention_forward(params, x, compute_dtype=jnp.float32)
    out_f32 = jax.block_until_ready(out_f32)
    assert out_f32.shape == (B, S, H)
    assert jnp.allclose(out_f32, ref, atol=2e-3, rtol=2e-3), "f32 mismatch vs reference"

    # default bf16 MXU path (f32 accumulation): looser tolerance
    out_bf16 = attention_forward(params, x)
    out_bf16 = jax.block_until_ready(out_bf16)
    assert out_bf16.shape == (B, S, H)
    assert jnp.allclose(out_bf16, ref, atol=2e-2, rtol=2e-2), "bf16 mismatch vs reference"

    print("KERNEL_OK")
</pallas_src>

<mosaic_0001>
module attributes {stable_mosaic.version = 11 : i64} {
  func.func @_qkv_kernel(%arg0: i32, %arg1: i32, %arg2: memref<16x32xf32, #tpu.memory_space<vmem>>, %arg3: memref<32x32xf32, #tpu.memory_space<vmem>>, %arg4: memref<32x32xf32, #tpu.memory_space<vmem>>, %arg5: memref<32x32xf32, #tpu.memory_space<vmem>>, %arg6: memref<1x32xf32, #tpu.memory_space<vmem>>, %arg7: memref<1x32xf32, #tpu.memory_space<vmem>>, %arg8: memref<1x32xf32, #tpu.memory_space<vmem>>, %arg9: memref<16x32xf32, #tpu.memory_space<vmem>>, %arg10: memref<16x32xf32, #tpu.memory_space<vmem>>, %arg11: memref<16x32xf32, #tpu.memory_space<vmem>>) attributes {dimension_semantics = [#tpu.dimension_semantics<parallel>, #tpu.dimension_semantics<parallel>], iteration_bounds = array<i64: 1, 1>, scalar_prefetch = 0 : i64, scratch_operands = 0 : i64, tpu.core_type = #tpu.core_type<tc>, window_params = [{transform_indices = @transform_0, window_bounds = array<i64: 16, 32>}, {transform_indices = @transform_1, window_bounds = array<i64: 32, 32>}, {transform_indices = @transform_2, window_bounds = array<i64: 32, 32>}, {transform_indices = @transform_3, window_bounds = array<i64: 32, 32>}, {transform_indices = @transform_4, window_bounds = array<i64: 1, 32>}, {transform_indices = @transform_5, window_bounds = array<i64: 1, 32>}, {transform_indices = @transform_6, window_bounds = array<i64: 1, 32>}, {transform_indices = @transform_7, window_bounds = array<i64: 16, 32>}, {transform_indices = @transform_8, window_bounds = array<i64: 16, 32>}, {transform_indices = @transform_9, window_bounds = array<i64: 16, 32>}]} {
    %c0 = arith.constant 0 : index
    %c0_0 = arith.constant 0 : index
    %0 = vector.load %arg2[%c0, %c0_0] : memref<16x32xf32, #tpu.memory_space<vmem>>, vector<16x32xf32>
    %c0_1 = arith.constant 0 : index
    %c0_2 = arith.constant 0 : index
    %1 = vector.load %arg3[%c0_1, %c0_2] : memref<32x32xf32, #tpu.memory_space<vmem>>, vector<32x32xf32>
    %cst = arith.constant dense<0.000000e+00> : vector<16x32xf32>
    %2 = tpu.matmul %0, %1, %cst {dimension_numbers = #tpu.dot_dimension_numbers<[1], [0], [0], [1], [0, 0, 1, 1], [], []>} : vector<16x32xf32>, vector<32x32xf32>, vector<16x32xf32> -> vector<16x32xf32>
    %c0_3 = arith.constant 0 : index
    %c0_4 = arith.constant 0 : index
    %3 = vector.load %arg6[%c0_3, %c0_4] : memref<1x32xf32, #tpu.memory_space<vmem>>, vector<1x32xf32>
    %4 = vector.broadcast %3 : vector<1x32xf32> to vector<16x32xf32>
    %5 = arith.addf %2, %4 : vector<16x32xf32>
    %c0_5 = arith.constant 0 : index
    %c0_6 = arith.constant 0 : index
    %6 = vector.load %arg9[%c0_5, %c0_6] : memref<16x32xf32, #tpu.memory_space<vmem>>, vector<16x32xf32>
    tpu.vector_store %arg9[%c0_5, %c0_6], %5 {strides = array<i32>} : memref<16x32xf32, #tpu.memory_space<vmem>>, vector<16x32xf32>,
    %c0_7 = arith.constant 0 : index
    %c0_8 = arith.constant 0 : index
    %7 = vector.load %arg4[%c0_7, %c0_8] : memref<32x32xf32, #tpu.memory_space<vmem>>, vector<32x32xf32>
    %cst_9 = arith.constant dense<0.000000e+00> : vector<16x32xf32>
    %8 = tpu.matmul %0, %7, %cst_9 {dimension_numbers = #tpu.dot_dimension_numbers<[1], [0], [0], [1], [0, 0, 1, 1], [], []>} : vector<16x32xf32>, vector<32x32xf32>, vector<16x32xf32> -> vector<16x32xf32>
    %c0_10 = arith.constant 0 : index
    %c0_11 = arith.constant 0 : index
    %9 = vector.load %arg7[%c0_10, %c0_11] : memref<1x32xf32, #tpu.memory_space<vmem>>, vector<1x32xf32>
    %10 = vector.broadcast %9 : vector<1x32xf32> to vector<16x32xf32>
    %11 = arith.addf %8, %10 : vector<16x32xf32>
    %c0_12 = arith.constant 0 : index
    %c0_13 = arith.constant 0 : index
    %12 = vector.load %arg10[%c0_12, %c0_13] : memref<16x32xf32, #tpu.memory_space<vmem>>, vector<16x32xf32>
    tpu.vector_store %arg10[%c0_12, %c0_13], %11 {strides = array<i32>} : memref<16x32xf32, #tpu.memory_space<vmem>>, vector<16x32xf32>,
    %c0_14 = arith.constant 0 : index
    %c0_15 = arith.constant 0 : index
    %13 = vector.load %arg5[%c0_14, %c0_15] : memref<32x32xf32, #tpu.memory_space<vmem>>, vector<32x32xf32>
    %cst_16 = arith.constant dense<0.000000e+00> : vector<16x32xf32>
    %14 = tpu.matmul %0, %13, %cst_16 {dimension_numbers = #tpu.dot_dimension_numbers<[1], [0], [0], [1], [0, 0, 1, 1], [], []>} : vector<16x32xf32>, vector<32x32xf32>, vector<16x32xf32> -> vector<16x32xf32>
    %c0_17 = arith.constant 0 : index
    %c0_18 = arith.constant 0 : index
    %15 = vector.load %arg8[%c0_17, %c0_18] : memref<1x32xf32, #tpu.memory_space<vmem>>, vector<1x32xf32>
    %16 = vector.broadcast %15 : vector<1x32xf32> to vector<16x32xf32>
    %17 = arith.addf %14, %16 : vector<16x32xf32>
    %c0_19 = arith.constant 0 : index
    %c0_20 = arith.constant 0 : index
    %18 = vector.load %arg11[%c0_19, %c0_20] : memref<16x32xf32, #tpu.memory_space<vmem>>, vector<16x32xf32>
    tpu.vector_store %arg11[%c0_19, %c0_20], %17 {strides = array<i32>} : memref<16x32xf32, #tpu.memory_space<vmem>>, vector<16x32xf32>,
    return
  }
  func.func @transform_0(%arg0: i32, %arg1: i32) -> (i32, i32) {
    %c0_i32 = arith.constant 0 : i32
    %c0_i32_0 = arith.constant 0 : i32
    return %arg0, %c0_i32 : i32, i32
  }
  func.func @transform_1(%arg0: i32, %arg1: i32) -> (i32, i32) {
    %c0_i32 = arith.constant 0 : i32
    %c0_i32_0 = arith.constant 0 : i32
    return %c0_i32, %arg1 : i32, i32
  }
  func.func @transform_2(%arg0: i32, %arg1: i32) -> (i32, i32) {
    %c0_i32 = arith.constant 0 : i32
    %c0_i32_0 = arith.constant 0 : i32
    return %c0_i32, %arg1 : i32, i32
  }
  func.func @transform_3(%arg0: i32, %arg1: i32) -> (i32, i32) {
    %c0_i32 = arith.constant 0 : i32
    %c0_i32_0 = arith.constant 0 : i32
    return %c0_i32, %arg1 : i32, i32
  }
  func.func @transform_4(%arg0: i32, %arg1: i32) -> (i32, i32) {
    %c0_i32 = arith.constant 0 : i32
    %c0_i32_0 = arith.constant 0 : i32
    return %c0_i32, %arg1 : i32, i32
  }
  func.func @transform_5(%arg0: i32, %arg1: i32) -> (i32, i32) {
    %c0_i32 = arith.constant 0 : i32
    %c0_i32_0 = arith.constant 0 : i32
    return %c0_i32, %arg1 : i32, i32
  }
  func.func @transform_6(%arg0: i32, %arg1: i32) -> (i32, i32) {
    %c0_i32 = arith.constant 0 : i32
    %c0_i32_0 = arith.constant 0 : i32
    return %c0_i32, %arg1 : i32, i32
  }
  func.func @transform_7(%arg0: i32, %arg1: i32) -> (i32, i32) {
    %c0_i32 = arith.constant 0 : i32
    return %arg0, %arg1 : i32, i32
  }
  func.func @transform_8(%arg0: i32, %arg1: i32) -> (i32, i32) {
    %c0_i32 = arith.constant 0 : i32
    return %arg0, %arg1 : i32, i32
  }
  func.func @transform_9(%arg0: i32, %arg1: i32) -> (i32, i32) {
    %c0_i32 = arith.constant 0 : i32
    return %arg0, %arg1 : i32, i32
  }
}

</mosaic_0001>

<llo_original>
// kernel: tpu_custom_call.1
$region0: #{tpu_custom_call.1}
  #allocation0 [shape = 'u32[]', space=smem, size = 0x4, offset = 0x4, fixed_abs, tag = 'smem constant byte address 0x4 - core index']
  #allocation1 [shape = 'u32[144,128]{1,0:T(1,128)}', space=vmem, size = 0x12000, scoped, tag = 'internal scratch']
  %s0 = inlined_call_operand.hbm [shape: f32[16,32], index: 0, kind: input, shape index: {}]
  %s1 = inlined_call_operand.hbm [shape: f32[32,32], index: 1, kind: input, shape index: {}]
  %s2 = inlined_call_operand.hbm [shape: f32[32,32], index: 2, kind: input, shape index: {}]
  %s3 = inlined_call_operand.hbm [shape: f32[32,32], index: 3, kind: input, shape index: {}]
  %s4 = inlined_call_operand.vmem [shape: f32[1,32], index: 4, kind: input, shape index: {}]
  %s5 = inlined_call_operand.vmem [shape: f32[1,32], index: 5, kind: input, shape index: {}]
  %s6 = inlined_call_operand.vmem [shape: f32[1,32], index: 6, kind: input, shape index: {}]
  %s7 = inlined_call_operand.hbm [shape: f32[16,32], index: 7, kind: output, shape index: {0}]
  %s8 = inlined_call_operand.hbm [shape: f32[16,32], index: 8, kind: output, shape index: {1}]
  %s9 = inlined_call_operand.hbm [shape: f32[16,32], index: 9, kind: output, shape index: {2}]
  %10 = xla_tuple %s7, %s8, %s9
  %s11 = sld [smem:[#allocation0]]
  $region70: #{tpu_custom_call.1} parent=0
    _
  %s13 = ssub.s32 1, %s11
  %s14 = scalar_select 0, %s13, %s11
  $region1: #{tpu_custom_call.1} parent=0
    #allocation2 [shape = 'u8[8192]{0}', space=vmem, size = 0x2000, scoped, tag = 'input window, operand 0, single buffered']
    #allocation3 [shape = 's32[1]{0}', space=sflag, size = 0x4, scoped, tag = 'scoped memory for tpu_custom_call.1']
    #allocation4 [shape = 's32[1]{0}', space=sflag, size = 0x4, scoped, tag = 'scoped memory for tpu_custom_call.1']
    #allocation5 [shape = 'u8[16384]{0}', space=vmem, size = 0x4000, scoped, tag = 'input window, operand 1, single buffered']
    #allocation6 [shape = 's32[1]{0}', space=sflag, size = 0x4, scoped, tag = 'scoped memory for tpu_custom_call.1']
    #allocation7 [shape = 'u8[16384]{0}', space=vmem, size = 0x4000, scoped, tag = 'input window, operand 2, single buffered']
    #allocation8 [shape = 'u8[16384]{0}', space=vmem, size = 0x4000, scoped, tag = 'input window, operand 3, single buffered']
    #allocation9 [shape = 's32[1]{0}', space=sflag, size = 0x4, scoped, tag = 'scoped memory for tpu_custom_call.1']
    #allocation10 [shape = 'u8[8192]{0}', space=vmem, size = 0x2000, scoped, tag = 'output window, operand 0, single buffered']
    #allocation11 [shape = 'u8[8192]{0}', space=vmem, size = 0x2000, scoped, tag = 'output window, operand 1, single buffered']
    #allocation12 [shape = 's32[1]{0}', space=sflag, size = 0x4, scoped, tag = 'scoped memory for tpu_custom_call.1']
    #allocation13 [shape = 'u8[8192]{0}', space=vmem, size = 0x2000, scoped, tag = 'output window, operand 2, single buffered']
    %15 = vsyncpa [#allocation3], 0
    %16 = vsyncpa [#allocation6], 0
    %17 = vsyncpa [#allocation9], 0
    %18 = vsyncpa [#allocation4], 0
    %19 = vsyncpa [#allocation12], 0
    // Predicated region
    $region2: #{tpu_custom_call.1} parent=1 // pred_check
      _
    $region3: #{tpu_custom_call.1} parent=1 // pred_check_branch
      %21 = sbr.rel (0) target = $region5
    $region4: #{tpu_custom_call.1} parent=1 // pred_region
      %s23 = ssub.s32 256, 256
      %24 = vsyncadd [#allocation3], %s23
      %s25 = sshll.u32 [#allocation2], 4
      %s26 = int_to_ptr.vmem [resolvable:$true] %s25
      %31 = dma.hbm_to_vmem [thread:$0]  %s0, 256, %s26, [#allocation3], 128, 128, 8
    $region5: #{tpu_custom_call.1} parent=1 // pred_fallthru
      _
    // Predicated region
    $region6: #{tpu_custom_call.1} parent=1 // pred_check
      _
    $region7: #{tpu_custom_call.1} parent=1 // pred_check_branch
      %33 = sbr.rel (0) target = $region9
    $region8: #{tpu_custom_call.1} parent=1 // pred_region
      %s35 = ssub.s32 512, 512
      %36 = vsyncadd [#allocation6], %s35
      %s37 = sshll.u32 [#allocation5], 4
      %s38 = int_to_ptr.vmem [resolvable:$true] %s37
      %43 = dma.hbm_to_vmem [thread:$0]  %s1, 512, %s38, [#allocation6], 128, 128, 8
    $region9: #{tpu_custom_call.1} parent=1 // pred_fallthru
      _
    // Predicated region
    $region10: #{tpu_custom_call.1} parent=1 // pred_check
      _
    $region11: #{tpu_custom_call.1} parent=1 // pred_check_branch
      %45 = sbr.rel (0) target = $region13
    $region12: #{tpu_custom_call.1} parent=1 // pred_region
      %s47 = ssub.s32 512, 512
      %48 = vsyncadd [#allocation6], %s47
      %s49 = sshll.u32 [#allocation7], 4
      %s50 = int_to_ptr.vmem [resolvable:$true] %s49
      %55 = dma.hbm_to_vmem [thread:$0]  %s2, 512, %s50, [#allocation6], 128, 128, 8
    $region13: #{tpu_custom_call.1} parent=1 // pred_fallthru
      _
    // Predicated region
    $region14: #{tpu_custom_call.1} parent=1 // pred_check
      _
    $region15: #{tpu_custom_call.1} parent=1 // pred_check_branch
      %57 = sbr.rel (0) target = $region17
    $region16: #{tpu_custom_call.1} parent=1 // pred_region
      %s59 = ssub.s32 512, 512
      %60 = vsyncadd [#allocation9], %s59
      %s61 = sshll.u32 [#allocation8], 4
      %s62 = int_to_ptr.vmem [resolvable:$true] %s61
      %67 = dma.hbm_to_vmem [thread:$0]  %s3, 512, %s62, [#allocation9], 128, 128, 8
    $region17: #{tpu_custom_call.1} parent=1 // pred_fallthru
      _
    // Predicated region
    $region18: #{tpu_custom_call.1} parent=1 // pred_check
      _
    $region19: #{tpu_custom_call.1} parent=1 // pred_check_branch
      %69 = sbr.rel (0) target = $region21
    $region20: #{tpu_custom_call.1} parent=1 // pred_region
      _
    $region21: #{tpu_custom_call.1} parent=1 // pred_fallthru
      _
    // Predicated region
    $region22: #{tpu_custom_call.1} parent=1 // pred_check
      _
    $region23: #{tpu_custom_call.1} parent=1 // pred_check_branch
      %71 = sbr.rel (0) target = $region25
    $region24: #{tpu_custom_call.1} parent=1 // pred_region
      _
    $region25: #{tpu_custom_call.1} parent=1 // pred_fallthru
      _
    // Predicated region
    $region26: #{tpu_custom_call.1} parent=1 // pred_check
      _
    $region27: #{tpu_custom_call.1} parent=1 // pred_check_branch
      %73 = sbr.rel (0) target = $region29
    $region28: #{tpu_custom_call.1} parent=1 // pred_region
      _
    $region29: #{tpu_custom_call.1} parent=1 // pred_fallthru
      _
    // Predicated region
    $region30: #{tpu_custom_call.1} parent=1 // pred_check
      _
    $region31: #{tpu_custom_call.1} parent=1 // pred_check_branch
      %75 = sbr.rel (0) target = $region33
    $region32: #{tpu_custom_call.1} parent=1 // pred_region
      %76 = dma.done [#allocation3], 256
    $region33: #{tpu_custom_call.1} parent=1 // pred_fallthru
      _
    // Predicated region
    $region34: #{tpu_custom_call.1} parent=1 // pred_check
      _
    $region35: #{tpu_custom_call.1} parent=1 // pred_check_branch
      %78 = sbr.rel (0) target = $region37
    $region36: #{tpu_custom_call.1} parent=1 // pred_region
      %79 = dma.done [#allocation6], 512
    $region37: #{tpu_custom_call.1} parent=1 // pred_fallthru
      _
    // Predicated region
    $region38: #{tpu_custom_call.1} parent=1 // pred_check
      _
    $region39: #{tpu_custom_call.1} parent=1 // pred_check_branch
      %81 = sbr.rel (0) target = $region41
    $region40: #{tpu_custom_call.1} parent=1 // pred_region
      %82 = dma.done [#allocation6], 512
    $region41: #{tpu_custom_call.1} parent=1 // pred_fallthru
      _
    // Predicated region
    $region42: #{tpu_custom_call.1} parent=1 // pred_check
      _
    $region43: #{tpu_custom_call.1} parent=1 // pred_check_branch
      %84 = sbr.rel (0) target = $region45
    $region44: #{tpu_custom_call.1} parent=1 // pred_region
      %85 = dma.done [#allocation9], 512
    $region45: #{tpu_custom_call.1} parent=1 // pred_fallthru
      _
    %v86 = vld [vmem:[#allocation2] sm:$0xff]
    %v87 = vld [vmem:[#allocation2 + $0x8] sm:$0xff]
    %v88 = vld [vmem:[#allocation5] sm:$0xff]
    %v89 = vld [vmem:[#allocation5 + $0x8] sm:$0xff]
    %v90 = vld [vmem:[#allocation5 + $0x10] sm:$0xff]
    %v91 = vld [vmem:[#allocation5 + $0x18] sm:$0xff]
    %v92 = vld [vmem:[%s4] sm:$0x1]
    %v94 = vlaneseq
    %v95 = vshrl.u32 %v94, 7
    %v96 = vsub.s32 0, %v95
    %v97 = vrot.slane %v92, %v96
    %vm99 = vcmask 261120
    %v101 = vsel %vm99, %v86, 0
    %v104 = vsel %vm99, %v87, 0
    %106 = vmatprep.subr.mxu0 0.0
    %107 = vmatpush1.msra.mxu0 %v88
    %108 = vmatprep.subr.mxu0 0.0
    %109 = vmatpush1.msra.mxu0 %v89
    %110 = vmatprep.subr.mxu0 0.0
    %111 = vmatpush1.msra.mxu0 %v90
    %112 = vmatprep.subr.mxu0 0.0
    %113 = vmatpush1.msra.mxu0 %v91
    %114 = vmatprep.subr.mxu0 0.0
    %115 = vmatpush1.msra.mxu0 0.0
    %116 = vmatprep.subr.mxu0 0.0
    %117 = vmatpush1.msra.mxu0 0.0
    %118 = vmatprep.subr.mxu0 0.0
    %119 = vmatpush1.msra.mxu0 0.0
    %120 = vmatprep.subr.mxu0 0.0
    %121 = vmatpush1.msra.mxu0 0.0
    %122 = vmatprep.subr.mxu0 0.0
    %123 = vmatpush1.msra.mxu0 0.0
    %124 = vmatprep.subr.mxu0 0.0
    %125 = vmatpush1.msra.mxu0 0.0
    %126 = vmatprep.subr.mxu0 0.0
    %127 = vmatpush1.msra.mxu0 0.0
    %128 = vmatprep.subr.mxu0 0.0
    %129 = vmatpush1.msra.mxu0 0.0
    %130 = vmatprep.subr.mxu0 0.0
    %131 = vmatpush1.msra.mxu0 0.0
    %132 = vmatprep.subr.mxu0 0.0
    %133 = vmatpush1.msra.mxu0 0.0
    %134 = vmatprep.subr.mxu0 0.0
    %135 = vmatpush1.msra.mxu0 0.0
    %136 = vmatprep.subr.mxu0 0.0
    %137 = vmatpush1.msra.mxu0 0.0
    %138 = vmatprep.subr.mxu0 0.0
    %139 = vmatpush1.msra.mxu0 0.0
    %140 = vmatprep.subr.mxu0 0.0
    %141 = vmatpush1.msra.mxu0 0.0
    %142 = vmatprep.subr.mxu0 0.0
    %143 = vmatpush1.msra.mxu0 0.0
    %144 = vmatprep.subr.mxu0 0.0
    %145 = vmatpush1.msra.mxu0 0.0
    %146 = vmatprep.subr.mxu0 0.0
    %147 = vmatpush1.msra.mxu0 0.0
    %148 = vmatprep.subr.mxu0 0.0
    %149 = vmatpush1.msra.mxu0 0.0
    %150 = vmatprep.subr.mxu0 0.0
    %151 = vmatpush1.msra.mxu0 0.0
    %152 = vmatprep.subr.mxu0 0.0
    %153 = vmatpush1.msra.mxu0 0.0
    %154 = vmatprep.subr.mxu0 0.0
    %155 = vmatpush1.msra.mxu0 0.0
    %156 = vmatprep.subr.mxu0 0.0
    %157 = vmatpush1.msra.mxu0 0.0
    %158 = vmatprep.subr.mxu0 0.0
    %159 = vmatpush1.msra.mxu0 0.0
    %160 = vmatprep.subr.mxu0 0.0
    %161 = vmatpush1.msra.mxu0 0.0
    %162 = vmatprep.subr.mxu0 0.0
    %163 = vmatpush1.msra.mxu0 0.0
    %164 = vmatprep.subr.mxu0 0.0
    %165 = vmatpush1.msra.mxu0 0.0
    %166 = vmatprep.subr.mxu0 0.0
    %167 = vmatpush1.msra.mxu0 0.0
    %168 = vmatprep.subr.mxu0 0.0
    %169 = vmatpush1.msra.mxu0 0.0
    %170 = vmatprep.mubr.f32.mxu0 0.0
    %171 = vmatmul.mubr.f32.gmra.mrb[0].mxu0 %v101
    %v172 = vpop.f32.mrb[0].mxu0
    %v173 = vadd.f32 %v97, %v172
    %v174 = vpop.f32.mrb[0].mxu0
    %175 = vmatprep.mubr.f32.mxu0 0.0
    %176 = vmatmul.mubr.f32.gmra.mrb[0].mxu0 %v104
    %v177 = vpop.f32.mrb[0].mxu0
    %v178 = vadd.f32 %v97, %v177
    %v179 = vpop.f32.mrb[0].mxu0
    %180 = vdwg.mxu0
    %181 = vst.msk [vmem:[#allocation10] sm:$0xff] %vm99, %v173
    %182 = vst.msk [vmem:[#allocation10 + $0x8] sm:$0xff] %vm99, %v178
    %v183 = vld [vmem:[#allocation7] sm:$0xff]
    %v184 = vld [vmem:[#allocation7 + $0x8] sm:$0xff]
    %v185 = vld [vmem:[#allocation7 + $0x10] sm:$0xff]
    %v186 = vld [vmem:[#allocation7 + $0x18] sm:$0xff]
    %v187 = vld [vmem:[%s5] sm:$0x1]
    %v189 = vlaneseq
    %v190 = vshrl.u32 %v189, 7
    %v191 = vsub.s32 0, %v190
    %v192 = vrot.slane %v187, %v191
    %194 = vmatprep.subr.mxu0 0.0
    %195 = vmatpush1.msra.mxu0 %v183
    %196 = vmatprep.subr.mxu0 0.0
    %197 = vmatpush1.msra.mxu0 %v184
    %198 = vmatprep.subr.mxu0 0.0
    %199 = vmatpush1.msra.mxu0 %v185
    %200 = vmatprep.subr.mxu0 0.0
    %201 = vmatpush1.msra.mxu0 %v186
    %202 = vmatprep.subr.mxu0 0.0
    %203 = vmatpush1.msra.mxu0 0.0
    %204 = vmatprep.subr.mxu0 0.0
    %205 = vmatpush1.msra.mxu0 0.0
    %206 = vmatprep.subr.mxu0 0.0
    %207 = vmatpush1.msra.mxu0 0.0
    %208 = vmatprep.subr.mxu0 0.0
    %209 = vmatpush1.msra.mxu0 0.0
    %210 = vmatprep.subr.mxu0 0.0
    %211 = vmatpush1.msra.mxu0 0.0
    %212 = vmatprep.subr.mxu0 0.0
    %213 = vmatpush1.msra.mxu0 0.0
    %214 = vmatprep.subr.mxu0 0.0
    %215 = vmatpush1.msra.mxu0 0.0
    %216 = vmatprep.subr.mxu0 0.0
    %217 = vmatpush1.msra.mxu0 0.0
    %218 = vmatprep.subr.mxu0 0.0
    %219 = vmatpush1.msra.mxu0 0.0
    %220 = vmatprep.subr.mxu0 0.0
    %221 = vmatpush1.msra.mxu0 0.0
    %222 = vmatprep.subr.mxu0 0.0
    %223 = vmatpush1.msra.mxu0 0.0
    %224 = vmatprep.subr.mxu0 0.0
    %225 = vmatpush1.msra.mxu0 0.0
    %226 = vmatprep.subr.mxu0 0.0
    %227 = vmatpush1.msra.mxu0 0.0
    %228 = vmatprep.subr.mxu0 0.0
    %229 = vmatpush1.msra.mxu0 0.0
    %230 = vmatprep.subr.mxu0 0.0
    %231 = vmatpush1.msra.mxu0 0.0
    %232 = vmatprep.subr.mxu0 0.0
    %233 = vmatpush1.msra.mxu0 0.0
    %234 = vmatprep.subr.mxu0 0.0
    %235 = vmatpush1.msra.mxu0 0.0
    %236 = vmatprep.subr.mxu0 0.0
    %237 = vmatpush1.msra.mxu0 0.0
    %238 = vmatprep.subr.mxu0 0.0
    %239 = vmatpush1.msra.mxu0 0.0
    %240 = vmatprep.subr.mxu0 0.0
    %241 = vmatpush1.msra.mxu0 0.0
    %242 = vmatprep.subr.mxu0 0.0
    %243 = vmatpush1.msra.mxu0 0.0
    %244 = vmatprep.subr.mxu0 0.0
    %245 = vmatpush1.msra.mxu0 0.0
    %246 = vmatprep.subr.mxu0 0.0
    %247 = vmatpush1.msra.mxu0 0.0
    %248 = vmatprep.subr.mxu0 0.0
    %249 = vmatpush1.msra.mxu0 0.0
    %250 = vmatprep.subr.mxu0 0.0
    %251 = vmatpush1.msra.mxu0 0.0
    %252 = vmatprep.subr.mxu0 0.0
    %253 = vmatpush1.msra.mxu0 0.0
    %254 = vmatprep.subr.mxu0 0.0
    %255 = vmatpush1.msra.mxu0 0.0
    %256 = vmatprep.subr.mxu0 0.0
    %257 = vmatpush1.msra.mxu0 0.0
    %258 = vmatprep.mubr.f32.mxu0 0.0
    %259 = vmatmul.mubr.f32.gmra.mrb[0].mxu0 %v101
    %v260 = vpop.f32.mrb[0].mxu0
    %v261 = vadd.f32 %v192, %v260
    %v262 = vpop.f32.mrb[0].mxu0
    %263 = vmatprep.mubr.f32.mxu0 0.0
    %264 = vmatmul.mubr.f32.gmra.mrb[0].mxu0 %v104
    %v265 = vpop.f32.mrb[0].mxu0
    %v266 = vadd.f32 %v192, %v265
    %v267 = vpop.f32.mrb[0].mxu0
    %268 = vdwg.mxu0
    %269 = vst.msk [vmem:[#allocation11] sm:$0xff] %vm99, %v261
    %270 = vst.msk [vmem:[#allocation11 + $0x8] sm:$0xff] %vm99, %v266
    %v271 = vld [vmem:[#allocation8] sm:$0xff]
    %v272 = vld [vmem:[#allocation8 + $0x8] sm:$0xff]
    %v273 = vld [vmem:[#allocation8 + $0x10] sm:$0xff]
    %v274 = vld [vmem:[#allocation8 + $0x18] sm:$0xff]
    %v275 = vld [vmem:[%s6] sm:$0x1]
    %v277 = vlaneseq
    %v278 = vshrl.u32 %v277, 7
    %v279 = vsub.s32 0, %v278
    %v280 = vrot.slane %v275, %v279
    %282 = vmatprep.subr.mxu0 0.0
    %283 = vmatpush1.msra.mxu0 %v271
    %284 = vmatprep.subr.mxu0 0.0
    %285 = vmatpush1.msra.mxu0 %v272
    %286 = vmatprep.subr.mxu0 0.0
    %287 = vmatpush1.msra.mxu0 %v273
    %288 = vmatprep.subr.mxu0 0.0
    %289 = vmatpush1.msra.mxu0 %v274
    %290 = vmatprep.subr.mxu0 0.0
    %291 = vmatpush1.msra.mxu0 0.0
    %292 = vmatprep.subr.mxu0 0.0
    %293 = vmatpush1.msra.mxu0 0.0
    %294 = vmatprep.subr.mxu0 0.0
    %295 = vmatpush1.msra.mxu0 0.0
    %296 = vmatprep.subr.mxu0 0.0
    %297 = vmatpush1.msra.mxu0 0.0
    %298 = vmatprep.subr.mxu0 0.0
    %299 = vmatpush1.msra.mxu0 0.0
    %300 = vmatprep.subr.mxu0 0.0
    %301 = vmatpush1.msra.mxu0 0.0
    %302 = vmatprep.subr.mxu0 0.0
    %303 = vmatpush1.msra.mxu0 0.0
    %304 = vmatprep.subr.mxu0 0.0
    %305 = vmatpush1.msra.mxu0 0.0
    %306 = vmatprep.subr.mxu0 0.0
    %307 = vmatpush1.msra.mxu0 0.0
    %308 = vmatprep.subr.mxu0 0.0
    %309 = vmatpush1.msra.mxu0 0.0
    %310 = vmatprep.subr.mxu0 0.0
    %311 = vmatpush1.msra.mxu0 0.0
    %312 = vmatprep.subr.mxu0 0.0
    %313 = vmatpush1.msra.mxu0 0.0
    %314 = vmatprep.subr.mxu0 0.0
    %315 = vmatpush1.msra.mxu0 0.0
    %316 = vmatprep.subr.mxu0 0.0
    %317 = vmatpush1.msra.mxu0 0.0
    %318 = vmatprep.subr.mxu0 0.0
    %319 = vmatpush1.msra.mxu0 0.0
    %320 = vmatprep.subr.mxu0 0.0
    %321 = vmatpush1.msra.mxu0 0.0
    %322 = vmatprep.subr.mxu0 0.0
    %323 = vmatpush1.msra.mxu0 0.0
    %324 = vmatprep.subr.mxu0 0.0
    %325 = vmatpush1.msra.mxu0 0.0
    %326 = vmatprep.subr.mxu0 0.0
    %327 = vmatpush1.msra.mxu0 0.0
    %328 = vmatprep.subr.mxu0 0.0
    %329 = vmatpush1.msra.mxu0 0.0
    %330 = vmatprep.subr.mxu0 0.0
    %331 = vmatpush1.msra.mxu0 0.0
    %332 = vmatprep.subr.mxu0 0.0
    %333 = vmatpush1.msra.mxu0 0.0
    %334 = vmatprep.subr.mxu0 0.0
    %335 = vmatpush1.msra.mxu0 0.0
    %336 = vmatprep.subr.mxu0 0.0
    %337 = vmatpush1.msra.mxu0 0.0
    %338 = vmatprep.subr.mxu0 0.0
    %339 = vmatpush1.msra.mxu0 0.0
    %340 = vmatprep.subr.mxu0 0.0
    %341 = vmatpush1.msra.mxu0 0.0
    %342 = vmatprep.subr.mxu0 0.0
    %343 = vmatpush1.msra.mxu0 0.0
    %344 = vmatprep.subr.mxu0 0.0
    %345 = vmatpush1.msra.mxu0 0.0
    %346 = vmatprep.mubr.f32.mxu0 0.0
    %347 = vmatmul.mubr.f32.gmra.mrb[0].mxu0 %v101
    %v348 = vpop.f32.mrb[0].mxu0
    %v349 = vadd.f32 %v280, %v348
    %v350 = vpop.f32.mrb[0].mxu0
    %351 = vmatprep.mubr.f32.mxu0 0.0
    %352 = vmatmul.mubr.f32.gmra.mrb[0].mxu0 %v104
    %v353 = vpop.f32.mrb[0].mxu0
    %v354 = vadd.f32 %v280, %v353
    %v355 = vpop.f32.mrb[0].mxu0
    %356 = vdwg.mxu0
    %357 = vst.msk [vmem:[#allocation13] sm:$0xff] %vm99, %v349
    %358 = vst.msk [vmem:[#allocation13 + $0x8] sm:$0xff] %vm99, %v354
    // Predicated region
    $region46: #{tpu_custom_call.1} parent=1 // pred_check
      _
    $region47: #{tpu_custom_call.1} parent=1 // pred_check_branch
      %360 = sbr.rel (0) target = $region49
    $region48: #{tpu_custom_call.1} parent=1 // pred_region
      %s362 = ssub.s32 256, 256
      %363 = vsyncadd [#allocation4], %s362
      %s364 = sshll.u32 [#allocation10], 4
      %s365 = int_to_ptr.vmem [resolvable:$true] %s364
      %370 = dma.vmem_to_hbm [thread:$0]  %s365, 256, %s7, [#allocation4], 128, 128, 8
    $region49: #{tpu_custom_call.1} parent=1 // pred_fallthru
      _
    // Predicated region
    $region50: #{tpu_custom_call.1} parent=1 // pred_check
      _
    $region51: #{tpu_custom_call.1} parent=1 // pred_check_branch
      %372 = sbr.rel (0) target = $region53
    $region52: #{tpu_custom_call.1} parent=1 // pred_region
      %s374 = ssub.s32 256, 256
      %375 = vsyncadd [#allocation12], %s374
      %s376 = sshll.u32 [#allocation11], 4
      %s377 = int_to_ptr.vmem [resolvable:$true] %s376
      %382 = dma.vmem_to_hbm [thread:$0]  %s377, 256, %s8, [#allocation12], 128, 128, 8
    $region53: #{tpu_custom_call.1} parent=1 // pred_fallthru
      _
    // Predicated region
    $region54: #{tpu_custom_call.1} parent=1 // pred_check
      _
    $region55: #{tpu_custom_call.1} parent=1 // pred_check_branch
      %384 = sbr.rel (0) target = $region57
    $region56: #{tpu_custom_call.1} parent=1 // pred_region
      %s386 = ssub.s32 256, 256
      %387 = vsyncadd [#allocation12], %s386
      %s388 = sshll.u32 [#allocation13], 4
      %s389 = int_to_ptr.vmem [resolvable:$true] %s388
      %394 = dma.vmem_to_hbm [thread:$0]  %s389, 256, %s9, [#allocation12], 128, 128, 8
    $region57: #{tpu_custom_call.1} parent=1 // pred_fallthru
      _
    // Predicated region
    $region58: #{tpu_custom_call.1} parent=1 // pred_check
      _
    $region59: #{tpu_custom_call.1} parent=1 // pred_check_branch
      %396 = sbr.rel (0) target = $region61
    $region60: #{tpu_custom_call.1} parent=1 // pred_region
      %397 = dma.done [#allocation4], 256
    $region61: #{tpu_custom_call.1} parent=1 // pred_fallthru
      _
    // Predicated region
    $region62: #{tpu_custom_call.1} parent=1 // pred_check
      _
    $region63: #{tpu_custom_call.1} parent=1 // pred_check_branch
      %399 = sbr.rel (0) target = $region65
    $region64: #{tpu_custom_call.1} parent=1 // pred_region
      %400 = dma.done [#allocation12], 256
    $region65: #{tpu_custom_call.1} parent=1 // pred_fallthru
      _
    // Predicated region
    $region66: #{tpu_custom_call.1} parent=1 // pred_check
      _
    $region67: #{tpu_custom_call.1} parent=1 // pred_check_branch
      %402 = sbr.rel (0) target = $region69
    $region68: #{tpu_custom_call.1} parent=1 // pred_region
      %403 = dma.done [#allocation12], 256
    $region69: #{tpu_custom_call.1} parent=1 // pred_fallthru
      _
    %404 = vsyncpa [#allocation3], 1
    %405 = vsyncpa [#allocation6], 1
    %406 = vsyncpa [#allocation9], 1
    %407 = vsyncpa [#allocation4], 1
    %408 = vsyncpa [#allocation12], 1

</llo_original>
